<compile_context>
chip_gen: v7x
topology: tpu7x:2x2x1
jax: 0.10.0
libtpu: 0.0.40
codegen_flags: <defaults>
</compile_context>

<pallas_src>
import functools

import jax
import jax.numpy as jnp
from jax.experimental import pallas as pl
from jax.experimental.pallas import tpu as pltpu

LANE = 128


def _round_up(a: int, b: int) -> int:
    return -(-a // b) * b


@functools.lru_cache(maxsize=1)
def _vmem_capacity_bytes() -> int:
    """Physical VMEM per TensorCore; conservative 64 MiB (v7x) fallback."""
    try:
        info = pltpu.get_tpu_info()
        cap = int(getattr(info, "vmem_capacity_bytes", 0) or 0)
        if cap > 0:
            return cap
    except Exception:
        pass
    return 64 << 20


def _pad_cast_2d(a, rows, cols, dtype):
    """Zero-pad to (rows, cols) and cast; skips copies when already aligned."""
    r, c = a.shape
    if (r, c) == (rows, cols):
        return a if a.dtype == dtype else a.astype(dtype)
    out = jnp.zeros((rows, cols), dtype)
    return out.at[:r, :c].set(a.astype(dtype))


# --------------------------------------------------------------------------
# Kernels
# --------------------------------------------------------------------------
def _mlp_resident_kernel(x_ref, w1_ref, b1_ref, w2_ref, b2_ref, o_ref):
    """Both weights resident in VMEM; 1-D grid over row tiles."""
    h = jnp.dot(x_ref[...], w1_ref[...], preferred_element_type=jnp.float32)
    h = jnp.maximum(h + b1_ref[...], 0.0)
    out = jnp.dot(h.astype(w2_ref.dtype), w2_ref[...],
                  preferred_element_type=jnp.float32)
    o_ref[...] = (out + b2_ref[...]).astype(o_ref.dtype)


def _mlp_streamed_kernel_f32out(x_ref, w1_ref, b1_ref, w2_ref, b2_ref, o_ref):
    """Streamed 2H contraction; accumulate directly into the resident f32 out tile."""
    k = pl.program_id(1)
    h = jnp.dot(x_ref[...], w1_ref[...], preferred_element_type=jnp.float32)
    h = jnp.maximum(h + b1_ref[...], 0.0)
    contrib = jnp.dot(h.astype(w2_ref.dtype), w2_ref[...],
                      preferred_element_type=jnp.float32)

    @pl.when(k == 0)
    def _init():
        o_ref[...] = contrib + b2_ref[...]

    @pl.when(k != 0)
    def _accum():
        o_ref[...] += contrib


def _mlp_streamed_kernel_acc(x_ref, w1_ref, b1_ref, w2_ref, b2_ref, o_ref, acc_ref):
    """Streamed 2H contraction with f32 scratch (non-f32 output dtype)."""
    k = pl.program_id(1)

    @pl.when(k == 0)
    def _init():
        acc_ref[...] = jnp.zeros_like(acc_ref)

    h = jnp.dot(x_ref[...], w1_ref[...], preferred_element_type=jnp.float32)
    h = jnp.maximum(h + b1_ref[...], 0.0)
    acc_ref[...] += jnp.dot(h.astype(w2_ref.dtype), w2_ref[...],
                            preferred_element_type=jnp.float32)

    @pl.when(k == pl.num_programs(1) - 1)
    def _finalize():
        o_ref[...] = (acc_ref[...] + b2_ref[...]).astype(o_ref.dtype)


# --------------------------------------------------------------------------
# Wrapper
# --------------------------------------------------------------------------
@functools.partial(jax.jit, static_argnames=("use_bf16", "force_streamed"))
def mlp_forward(x, w1, b1, w2, b2, *, use_bf16=True, force_streamed=False):
    """Fused two-layer MLP: relu(x @ w1 + b1) @ w2 + b2."""
    M, H = x.shape
    H2 = w1.shape[1]
    assert w1.shape == (H, H2) and b1.shape == (H2,)
    assert w2.shape == (H2, H) and b2.shape == (H,)
    out_dtype = x.dtype
    compute_dtype = jnp.bfloat16 if use_bf16 else jnp.float32
    cbytes = jnp.dtype(compute_dtype).itemsize
    granule = 16 if use_bf16 else 8

    Hp = _round_up(H, LANE)
    H2_128 = _round_up(H2, LANE)

    cap = _vmem_capacity_bytes()
    budget = min(cap, 128 << 20) - (16 << 20)   # headroom for Mosaic internals
    hard_limit = min(cap, 128 << 20) - (4 << 20)

    out_bytes = jnp.dtype(out_dtype).itemsize

    # ---------------- resident fast-path decision -------------------------
    def resident_bytes(tm):
        return (
            2 * 2 * Hp * H2_128 * cbytes   # w1 + w2 (counted double-buffered)
            + 2 * tm * Hp * cbytes         # x tile (double-buffered)
            + 2 * tm * Hp * 4              # out tile
            + tm * H2_128 * 4              # f32 h intermediate
            + tm * Hp * 4                  # second-matmul result
            + 2 * (H2_128 + Hp) * 4        # biases
        )

    Mg = _round_up(M, granule)
    # >= 2 row tiles when M allows, so v7x's second TensorCore gets work.
    ntiles_res = max(-(-M // 256), 2 if Mg >= 2 * granule else 1)
    tm_res = _round_up(-(-M // ntiles_res), granule)

    use_resident = (not force_streamed) and resident_bytes(tm_res) <= budget

    if use_resident:
        tm = tm_res
        ntiles = ntiles_res
        Mp = ntiles * tm
        H2p = H2_128

        xp = _pad_cast_2d(x, Mp, Hp, compute_dtype)
        w1p = _pad_cast_2d(w1, Hp, H2p, compute_dtype)
        w2p = _pad_cast_2d(w2, H2p, Hp, compute_dtype)
        b1p = _pad_cast_2d(b1.reshape(1, -1), 1, H2p, jnp.float32)
        b2p = _pad_cast_2d(b2.reshape(1, -1), 1, Hp, jnp.float32)

        need = resident_bytes(tm)
        vmem_limit = int(min(hard_limit, max(need + (8 << 20), 32 << 20)))

        cost = pl.CostEstimate(
            flops=2 * Mp * Hp * H2p + 2 * Mp * H2p * Hp,
            transcendentals=0,
            bytes_accessed=(xp.size * cbytes + w1p.size * cbytes
                            + w2p.size * cbytes + (b1p.size + b2p.size) * 4
                            + Mp * Hp * out_bytes),
        )

        out_padded = pl.pallas_call(
            _mlp_resident_kernel,
            out_shape=jax.ShapeDtypeStruct((Mp, Hp), out_dtype),
            grid_spec=pltpu.PrefetchScalarGridSpec(
                num_scalar_prefetch=0,
                grid=(ntiles,),
                in_specs=[
                    pl.BlockSpec((tm, Hp), lambda i: (i, 0)),     # x row tile
                    pl.BlockSpec((Hp, H2p), lambda i: (0, 0)),    # w1 resident
                    pl.BlockSpec((1, H2p), lambda i: (0, 0)),     # b1 resident
                    pl.BlockSpec((H2p, Hp), lambda i: (0, 0)),    # w2 resident
                    pl.BlockSpec((1, Hp), lambda i: (0, 0)),      # b2 resident
                ],
                out_specs=pl.BlockSpec((tm, Hp), lambda i: (i, 0)),
            ),
            compiler_params=pltpu.CompilerParams(
                dimension_semantics=("parallel",),
                vmem_limit_bytes=vmem_limit,
            ),
            cost_estimate=cost,
        )(xp, w1p, b1p, w2p, b2p)
        return out_padded[:M, :H]

    # ---------------- streamed path (large weights) -----------------------
    direct_out = jnp.dtype(out_dtype) == jnp.dtype(jnp.float32)

    def streamed_bytes(tm, tk):
        return (
            2 * tm * Hp * cbytes                      # x tile
            + 2 * Hp * tk * cbytes                    # w1 k-slice
            + 2 * tk * Hp * cbytes                    # w2 k-slice
            + 2 * tm * Hp * 4                         # out tile (f32 or cast)
            + (0 if direct_out else tm * Hp * 4)      # acc scratch
            + tm * tk * 4 + tm * Hp * 4               # h + contrib intermediates
            + 2 * (H2_128 + Hp) * 4                   # biases
        )

    tk_candidates = [t for t in (1024, 512, 256, 128) if t <= max(H2_128, 128)]
    tm_candidates = (512, 256, 128, 64, 32, 16)
    tm_sel, tk_sel = 16, 128
    found = False
    for tk_c in tk_candidates:
        # Avoid excessive padding of the 2H axis (>~12.5%) except at tk=128.
        if tk_c != 128 and _round_up(H2, tk_c) > H2_128 + max(H2_128 // 8, LANE):
            continue
        for tm_c in tm_candidates:
            if streamed_bytes(tm_c, tk_c) <= budget:
                tm_sel, tk_sel = tm_c, tk_c
                found = True
                break
        if found:
            break
    # TODO(synk): for extremely large Hp that still overflows VMEM, an output-
    #             column grid axis (3-D grid) would be needed; not implemented.

    ntiles = max(1, -(-M // tm_sel))
    tm = _round_up(-(-M // ntiles), granule)
    Mp = ntiles * tm
    tk = tk_sel
    H2p = _round_up(H2, tk)

    xp = _pad_cast_2d(x, Mp, Hp, compute_dtype)
    w1p = _pad_cast_2d(w1, Hp, H2p, compute_dtype)
    w2p = _pad_cast_2d(w2, H2p, Hp, compute_dtype)
    b1p = _pad_cast_2d(b1.reshape(1, -1), 1, H2p, jnp.float32)
    b2p = _pad_cast_2d(b2.reshape(1, -1), 1, Hp, jnp.float32)

    need = streamed_bytes(tm, tk)
    vmem_limit = int(min(hard_limit, max(need + (8 << 20), 32 << 20)))
    grid = (Mp // tm, H2p // tk)

    cost = pl.CostEstimate(
        flops=2 * Mp * Hp * H2p + 2 * Mp * H2p * Hp,
        transcendentals=0,
        bytes_accessed=(xp.size * cbytes
                        + grid[0] * (w1p.size + w2p.size) * cbytes
                        + (b1p.size + b2p.size) * 4
                        + Mp * Hp * out_bytes),
    )

    kernel = _mlp_streamed_kernel_f32out if direct_out else _mlp_streamed_kernel_acc
    scratch = [] if direct_out else [pltpu.VMEM((tm, Hp), jnp.float32)]

    out_padded = pl.pallas_call(
        kernel,
        out_shape=jax.ShapeDtypeStruct((Mp, Hp), out_dtype),
        grid_spec=pltpu.PrefetchScalarGridSpec(
            num_scalar_prefetch=0,
            grid=grid,
            in_specs=[
                pl.BlockSpec((tm, Hp), lambda i, k: (i, 0)),    # x row tile
                pl.BlockSpec((Hp, tk), lambda i, k: (0, k)),    # w1 k-slice
                pl.BlockSpec((1, tk), lambda i, k: (0, k)),     # b1 k-slice
                pl.BlockSpec((tk, Hp), lambda i, k: (k, 0)),    # w2 k-slice
                pl.BlockSpec((1, Hp), lambda i, k: (0, 0)),     # b2
            ],
            out_specs=pl.BlockSpec((tm, Hp), lambda i, k: (i, 0)),
            scratch_shapes=scratch,
        ),
        compiler_params=pltpu.CompilerParams(
            dimension_semantics=("parallel", "arbitrary"),
            vmem_limit_bytes=vmem_limit,
        ),
        cost_estimate=cost,
    )(xp, w1p, b1p, w2p, b2p)
    return out_padded[:M, :H]


# --------------------------------------------------------------------------
# Demo / self-check
# --------------------------------------------------------------------------
def _bf16_matched_reference(x, w1, b1, w2, b2):
    xb, w1b, w2b = (t.astype(jnp.bfloat16) for t in (x, w1, w2))
    h = jnp.maximum(jnp.dot(xb, w1b, preferred_element_type=jnp.float32) + b1, 0.0)
    return jnp.dot(h.astype(jnp.bfloat16), w2b,
                   preferred_element_type=jnp.float32) + b2


if __name__ == "__main__":
    # --- primary demo shapes (resident fast path) -------------------------
    hidden_size = 32
    batch = 8

    key = jax.random.PRNGKey(0)
    kx, kw1, kw2 = jax.random.split(key, 3)

    # Parameter init mirroring MLP.__init__ shapes:
    #   weight1 ~ randn(H, 2H), bias1 = zeros(2H)
    #   weight2 ~ randn(2H, H), bias2 = zeros(H)
    x = jax.random.normal(kx, (batch, hidden_size), dtype=jnp.float32)
    w1 = jax.random.normal(kw1, (hidden_size, 2 * hidden_size), dtype=jnp.float32)
    b1 = jnp.zeros((2 * hidden_size,), dtype=jnp.float32)
    w2 = jax.random.normal(kw2, (2 * hidden_size, hidden_size), dtype=jnp.float32)
    b2 = jnp.zeros((hidden_size,), dtype=jnp.float32)

    y = mlp_forward(x, w1, b1, w2, b2)
    y = jax.block_until_ready(y)
    assert y.shape == (batch, hidden_size)
    assert y.dtype == x.dtype
    ref = _bf16_matched_reference(x, w1, b1, w2, b2)
    assert jnp.allclose(y, ref, atol=1e-2, rtol=1e-3), "resident path mismatch"

    # --- exercise the streamed (k-accumulating) path too -------------------
    H_big, M_big = 1024, 64
    kx2, kw3, kw4 = jax.random.split(jax.random.PRNGKey(0), 3)
    x2 = jax.random.normal(kx2, (M_big, H_big), dtype=jnp.float32)
    w1b_ = jax.random.normal(kw3, (H_big, 2 * H_big), dtype=jnp.float32)
    b1b_ = jnp.zeros((2 * H_big,), dtype=jnp.float32)
    w2b_ = jax.random.normal(kw4, (2 * H_big, H_big), dtype=jnp.float32)
    b2b_ = jnp.zeros((H_big,), dtype=jnp.float32)

    y2 = mlp_forward(x2, w1b_, b1b_, w2b_, b2b_, force_streamed=True)
    y2 = jax.block_until_ready(y2)
    ref2 = _bf16_matched_reference(x2, w1b_, b1b_, w2b_, b2b_)
    assert jnp.allclose(y2, ref2, atol=5e-2, rtol=5e-3), "streamed path mismatch"

    print("KERNEL_OK")
</pallas_src>

<mosaic_0001>
module attributes {stable_mosaic.version = 11 : i64} {
  func.func @_mlp_resident_kernel(%arg0: i32, %arg1: memref<16x128xbf16, #tpu.memory_space<vmem>>, %arg2: memref<128x128xbf16, #tpu.memory_space<vmem>>, %arg3: memref<1x128xf32, #tpu.memory_space<vmem>>, %arg4: memref<128x128xbf16, #tpu.memory_space<vmem>>, %arg5: memref<1x128xf32, #tpu.memory_space<vmem>>, %arg6: memref<16x128xf32, #tpu.memory_space<vmem>>) attributes {dimension_semantics = [#tpu.dimension_semantics<parallel>], iteration_bounds = array<i64: 1>, scalar_prefetch = 0 : i64, scratch_operands = 0 : i64, tpu.core_type = #tpu.core_type<tc>, window_params = [{transform_indices = @transform_0, window_bounds = array<i64: 16, 128>}, {pipeline_mode = #tpu.pipeline_mode<synchronous>, transform_indices = @transform_1, window_bounds = array<i64: 128, 128>}, {pipeline_mode = #tpu.pipeline_mode<synchronous>, transform_indices = @transform_2, window_bounds = array<i64: 1, 128>}, {pipeline_mode = #tpu.pipeline_mode<synchronous>, transform_indices = @transform_3, window_bounds = array<i64: 128, 128>}, {pipeline_mode = #tpu.pipeline_mode<synchronous>, transform_indices = @transform_4, window_bounds = array<i64: 1, 128>}, {transform_indices = @transform_5, window_bounds = array<i64: 16, 128>}]} {
    %c0 = arith.constant 0 : index
    %c0_0 = arith.constant 0 : index
    %0 = vector.load %arg1[%c0, %c0_0] : memref<16x128xbf16, #tpu.memory_space<vmem>>, vector<16x128xbf16>
    %c0_1 = arith.constant 0 : index
    %c0_2 = arith.constant 0 : index
    %1 = vector.load %arg2[%c0_1, %c0_2] : memref<128x128xbf16, #tpu.memory_space<vmem>>, vector<128x128xbf16>
    %cst = arith.constant dense<0.000000e+00> : vector<16x128xf32>
    %2 = tpu.matmul %0, %1, %cst {dimension_numbers = #tpu.dot_dimension_numbers<[1], [0], [0], [1], [0, 0, 1, 1], [], []>} : vector<16x128xbf16>, vector<128x128xbf16>, vector<16x128xf32> -> vector<16x128xf32>
    %c0_3 = arith.constant 0 : index
    %c0_4 = arith.constant 0 : index
    %3 = vector.load %arg3[%c0_3, %c0_4] : memref<1x128xf32, #tpu.memory_space<vmem>>, vector<1x128xf32>
    %4 = vector.broadcast %3 : vector<1x128xf32> to vector<16x128xf32>
    %5 = arith.addf %2, %4 : vector<16x128xf32>
    %cst_5 = arith.constant 0.000000e+00 : f32
    %6 = vector.broadcast %cst_5 : f32 to vector<16x128xf32>
    %7 = arith.maximumf %5, %6 : vector<16x128xf32>
    %8 = arith.truncf %7 : vector<16x128xf32> to vector<16x128xbf16>
    %c0_6 = arith.constant 0 : index
    %c0_7 = arith.constant 0 : index
    %9 = vector.load %arg4[%c0_6, %c0_7] : memref<128x128xbf16, #tpu.memory_space<vmem>>, vector<128x128xbf16>
    %cst_8 = arith.constant dense<0.000000e+00> : vector<16x128xf32>
    %10 = tpu.matmul %8, %9, %cst_8 {dimension_numbers = #tpu.dot_dimension_numbers<[1], [0], [0], [1], [0, 0, 1, 1], [], []>} : vector<16x128xbf16>, vector<128x128xbf16>, vector<16x128xf32> -> vector<16x128xf32>
    %c0_9 = arith.constant 0 : index
    %c0_10 = arith.constant 0 : index
    %11 = vector.load %arg5[%c0_9, %c0_10] : memref<1x128xf32, #tpu.memory_space<vmem>>, vector<1x128xf32>
    %12 = vector.broadcast %11 : vector<1x128xf32> to vector<16x128xf32>
    %13 = arith.addf %10, %12 : vector<16x128xf32>
    %c0_11 = arith.constant 0 : index
    %c0_12 = arith.constant 0 : index
    %14 = vector.load %arg6[%c0_11, %c0_12] : memref<16x128xf32, #tpu.memory_space<vmem>>, vector<16x128xf32>
    tpu.vector_store %arg6[%c0_11, %c0_12], %13 {strides = array<i32>} : memref<16x128xf32, #tpu.memory_space<vmem>>, vector<16x128xf32>,
    return
  }
  func.func @transform_0(%arg0: i32) -> (i32, i32) {
    %c0_i32 = arith.constant 0 : i32
    %c0_i32_0 = arith.constant 0 : i32
    return %arg0, %c0_i32 : i32, i32
  }
  func.func @transform_1(%arg0: i32) -> (i32, i32) {
    %c0_i32 = arith.constant 0 : i32
    %c0_i32_0 = arith.constant 0 : i32
    %c0_i32_1 = arith.constant 0 : i32
    return %c0_i32, %c0_i32_0 : i32, i32
  }
  func.func @transform_2(%arg0: i32) -> (i32, i32) {
    %c0_i32 = arith.constant 0 : i32
    %c0_i32_0 = arith.constant 0 : i32
    %c0_i32_1 = arith.constant 0 : i32
    return %c0_i32, %c0_i32_0 : i32, i32
  }
  func.func @transform_3(%arg0: i32) -> (i32, i32) {
    %c0_i32 = arith.constant 0 : i32
    %c0_i32_0 = arith.constant 0 : i32
    %c0_i32_1 = arith.constant 0 : i32
    return %c0_i32, %c0_i32_0 : i32, i32
  }
  func.func @transform_4(%arg0: i32) -> (i32, i32) {
    %c0_i32 = arith.constant 0 : i32
    %c0_i32_0 = arith.constant 0 : i32
    %c0_i32_1 = arith.constant 0 : i32
    return %c0_i32, %c0_i32_0 : i32, i32
  }
  func.func @transform_5(%arg0: i32) -> (i32, i32) {
    %c0_i32 = arith.constant 0 : i32
    %c0_i32_0 = arith.constant 0 : i32
    return %arg0, %c0_i32 : i32, i32
  }
}

</mosaic_0001>

<llo_original>
// kernel: mlp_forward.1
$region0: #{mlp_forward.1}
  #allocation0 [shape = 'u32[]', space=smem, size = 0x4, offset = 0x4, fixed_abs, tag = 'smem constant byte address 0x4 - core index']
  #allocation1 [shape = 'u32[144,128]{1,0:T(1,128)}', space=vmem, size = 0x12000, scoped, tag = 'internal scratch']
  %s0 = inlined_call_operand.vmem [shape: bf16[16,128], index: 0, kind: input, shape index: {}]
  %s1 = inlined_call_operand.vmem [shape: bf16[128,128], index: 1, kind: input, shape index: {}]
  %s2 = inlined_call_operand.vmem [shape: f32[1,128], index: 2, kind: input, shape index: {}]
  %s3 = inlined_call_operand.vmem [shape: bf16[128,128], index: 3, kind: input, shape index: {}]
  %s4 = inlined_call_operand.vmem [shape: f32[1,128], index: 4, kind: input, shape index: {}]
  %s5 = inlined_call_operand.vmem [shape: f32[16,128], index: 5, kind: output, shape index: {}]
  %s6 = sld [smem:[#allocation0]]
  $region30: #{mlp_forward.1} parent=0
    _
  %s8 = ssub.s32 1, %s6
  %s9 = scalar_select 0, %s8, %s6
  // Predicated region
  $region2: #{mlp_forward.1} parent=0 // pred_check
    _
  $region3: #{mlp_forward.1} parent=0 // pred_check_branch
    %11 = sbr.rel (0) target = $region5
  $region4: #{mlp_forward.1} parent=0 // pred_region
    _
  $region5: #{mlp_forward.1} parent=0 // pred_fallthru
    _
  // Predicated region
  $region6: #{mlp_forward.1} parent=0 // pred_check
    _
  $region7: #{mlp_forward.1} parent=0 // pred_check_branch
    %13 = sbr.rel (0) target = $region9
  $region8: #{mlp_forward.1} parent=0 // pred_region
    _
  $region9: #{mlp_forward.1} parent=0 // pred_fallthru
    _
  // Predicated region
  $region10: #{mlp_forward.1} parent=0 // pred_check
    _
  $region11: #{mlp_forward.1} parent=0 // pred_check_branch
    %15 = sbr.rel (0) target = $region13
  $region12: #{mlp_forward.1} parent=0 // pred_region
    _
  $region13: #{mlp_forward.1} parent=0 // pred_fallthru
    _
  // Predicated region
  $region14: #{mlp_forward.1} parent=0 // pred_check
    _
  $region15: #{mlp_forward.1} parent=0 // pred_check_branch
    %17 = sbr.rel (0) target = $region17
  $region16: #{mlp_forward.1} parent=0 // pred_region
    _
  $region17: #{mlp_forward.1} parent=0 // pred_fallthru
    _
  // Predicated region
  $region18: #{mlp_forward.1} parent=0 // pred_check
    _
  $region19: #{mlp_forward.1} parent=0 // pred_check_branch
    %19 = sbr.rel (0) target = $region21
  $region20: #{mlp_forward.1} parent=0 // pred_region
    _
  $region21: #{mlp_forward.1} parent=0 // pred_fallthru
    _
  %v21 = vld [vmem:[%s0] sm:$0xf]
  %v22 = vld [vmem:[%s0 + $0x4] sm:$0xf]
  %v23 = vld [vmem:[%s1] sm:$0xf]
  %v24 = vld [vmem:[%s1 + $0x4] sm:$0xf]
  %v25 = vld [vmem:[%s1 + $0x8] sm:$0xf]
  %v26 = vld [vmem:[%s1 + $0xc] sm:$0xf]
  %v27 = vld [vmem:[%s1 + $0x10] sm:$0xf]
  %v28 = vld [vmem:[%s1 + $0x14] sm:$0xf]
  %v29 = vld [vmem:[%s1 + $0x18] sm:$0xf]
  %v30 = vld [vmem:[%s1 + $0x1c] sm:$0xf]
  %v31 = vld [vmem:[%s1 + $0x20] sm:$0xf]
  %v32 = vld [vmem:[%s1 + $0x24] sm:$0xf]
  %v33 = vld [vmem:[%s1 + $0x28] sm:$0xf]
  %v34 = vld [vmem:[%s1 + $0x2c] sm:$0xf]
  %v35 = vld [vmem:[%s1 + $0x30] sm:$0xf]
  %v36 = vld [vmem:[%s1 + $0x34] sm:$0xf]
  %v37 = vld [vmem:[%s1 + $0x38] sm:$0xf]
  %v38 = vld [vmem:[%s1 + $0x3c] sm:$0xf]
  %v39 = vld [vmem:[%s2] sm:$0x1]
  %v41 = vlaneseq
  %v42 = vshrl.u32 %v41, 7
  %v43 = vsub.s32 0, %v42
  %v44 = vrot.slane %v39, %v43
  %v48 = vunpack.c.l.b16 %v21
  %v49 = vunpack.c.l.b16 %v22
  %v50 = vpack.c.b16 %v49, %v48
  %v68 = vunpack.c.l.b16 %v23
  %v69 = vunpack.c.l.b16 %v24
  %v70 = vunpack.c.l.b16 %v25
  %v71 = vunpack.c.l.b16 %v26
  %v72 = vunpack.c.l.b16 %v27
  %v73 = vunpack.c.l.b16 %v28
  %v74 = vunpack.c.l.b16 %v29
  %v75 = vunpack.c.l.b16 %v30
  %v76 = vunpack.c.l.b16 %v31
  %v77 = vunpack.c.l.b16 %v32
  %v78 = vunpack.c.l.b16 %v33
  %v79 = vunpack.c.l.b16 %v34
  %v80 = vunpack.c.l.b16 %v35
  %v81 = vunpack.c.l.b16 %v36
  %v82 = vunpack.c.l.b16 %v37
  %v83 = vunpack.c.l.b16 %v38
  %v84 = vpack.c.b16 %v69, %v68
  %v85 = vpack.c.b16 %v71, %v70
  %v86 = vpack.c.b16 %v73, %v72
  %v87 = vpack.c.b16 %v75, %v74
  %v88 = vpack.c.b16 %v77, %v76
  %v89 = vpack.c.b16 %v79, %v78
  %v90 = vpack.c.b16 %v81, %v80
  %v91 = vpack.c.b16 %v83, %v82
  %100 = vmatprep.subr.bf16.mxu0 0
  %101 = vmatpush1.bf16.msra.mxu0 %v84
  %102 = vmatprep.subr.bf16.mxu0 0
  %103 = vmatpush1.bf16.msra.mxu0 %v85
  %104 = vmatprep.subr.bf16.mxu0 0
  %105 = vmatpush1.bf16.msra.mxu0 %v86
  %106 = vmatprep.subr.bf16.mxu0 0
  %107 = vmatpush1.bf16.msra.mxu0 %v87
  %108 = vmatprep.subr.bf16.mxu0 0
  %109 = vmatpush1.bf16.msra.mxu0 %v88
  %110 = vmatprep.subr.bf16.mxu0 0
  %111 = vmatpush1.bf16.msra.mxu0 %v89
  %112 = vmatprep.subr.bf16.mxu0 0
  %113 = vmatpush1.bf16.msra.mxu0 %v90
  %114 = vmatprep.subr.bf16.mxu0 0
  %115 = vmatpush1.bf16.msra.mxu0 %v91
  %116 = vmatprep.subr.bf16.mxu0 0
  %117 = vmatpush1.bf16.msra.mxu0 0
  %118 = vmatprep.subr.bf16.mxu0 0
  %119 = vmatpush1.bf16.msra.mxu0 0
  %120 = vmatprep.subr.bf16.mxu0 0
  %121 = vmatpush1.bf16.msra.mxu0 0
  %122 = vmatprep.subr.bf16.mxu0 0
  %123 = vmatpush1.bf16.msra.mxu0 0
  %124 = vmatprep.subr.bf16.mxu0 0
  %125 = vmatpush1.bf16.msra.mxu0 0
  %126 = vmatprep.subr.bf16.mxu0 0
  %127 = vmatpush1.bf16.msra.mxu0 0
  %128 = vmatprep.subr.bf16.mxu0 0
  %129 = vmatpush1.bf16.msra.mxu0 0
  %130 = vmatprep.subr.bf16.mxu0 0
  %131 = vmatpush1.bf16.msra.mxu0 0
  %132 = vmatprep.mubr.bf16.mxu0 0
  %133 = vmatmul.mubr.bf16.gmra.mrb[0].mxu0 %v50
  %v134 = vpop.f32.mrb[0].mxu0
  %v135 = vadd.f32 %v44, %v134
  %v136 = vpop.f32.mrb[0].mxu0
  %v137 = vpop.f32.mrb[0].mxu0
  %v138 = vadd.f32 %v44, %v137
  %v139 = vpop.f32.mrb[0].mxu0
  %140 = vdwg.mxu0
  %v141 = vmax.f32 %v135, 0.0
  %v142 = vmax.f32 %v138, 0.0
  %v143 = vpack.c.bf16 %v142, %v141
  %v144 = vld [vmem:[%s3] sm:$0xf]
  %v145 = vld [vmem:[%s3 + $0x4] sm:$0xf]
  %v146 = vld [vmem:[%s3 + $0x8] sm:$0xf]
  %v147 = vld [vmem:[%s3 + $0xc] sm:$0xf]
  %v148 = vld [vmem:[%s3 + $0x10] sm:$0xf]
  %v149 = vld [vmem:[%s3 + $0x14] sm:$0xf]
  %v150 = vld [vmem:[%s3 + $0x18] sm:$0xf]
  %v151 = vld [vmem:[%s3 + $0x1c] sm:$0xf]
  %v152 = vld [vmem:[%s3 + $0x20] sm:$0xf]
  %v153 = vld [vmem:[%s3 + $0x24] sm:$0xf]
  %v154 = vld [vmem:[%s3 + $0x28] sm:$0xf]
  %v155 = vld [vmem:[%s3 + $0x2c] sm:$0xf]
  %v156 = vld [vmem:[%s3 + $0x30] sm:$0xf]
  %v157 = vld [vmem:[%s3 + $0x34] sm:$0xf]
  %v158 = vld [vmem:[%s3 + $0x38] sm:$0xf]
  %v159 = vld [vmem:[%s3 + $0x3c] sm:$0xf]
  %v160 = vld [vmem:[%s4] sm:$0x1]
  %v162 = vlaneseq
  %v163 = vshrl.u32 %v162, 7
  %v164 = vsub.s32 0, %v163
  %v165 = vrot.slane %v160, %v164
  %v183 = vunpack.c.l.b16 %v144
  %v184 = vunpack.c.l.b16 %v145
  %v185 = vunpack.c.l.b16 %v146
  %v186 = vunpack.c.l.b16 %v147
  %v187 = vunpack.c.l.b16 %v148
  %v188 = vunpack.c.l.b16 %v149
  %v189 = vunpack.c.l.b16 %v150
  %v190 = vunpack.c.l.b16 %v151
  %v191 = vunpack.c.l.b16 %v152
  %v192 = vunpack.c.l.b16 %v153
  %v193 = vunpack.c.l.b16 %v154
  %v194 = vunpack.c.l.b16 %v155
  %v195 = vunpack.c.l.b16 %v156
  %v196 = vunpack.c.l.b16 %v157
  %v197 = vunpack.c.l.b16 %v158
  %v198 = vunpack.c.l.b16 %v159
  %v199 = vpack.c.b16 %v184, %v183
  %v200 = vpack.c.b16 %v186, %v185
  %v201 = vpack.c.b16 %v188, %v187
  %v202 = vpack.c.b16 %v190, %v189
  %v203 = vpack.c.b16 %v192, %v191
  %v204 = vpack.c.b16 %v194, %v193
  %v205 = vpack.c.b16 %v196, %v195
  %v206 = vpack.c.b16 %v198, %v197
  %215 = vmatprep.subr.bf16.mxu0 0
  %216 = vmatpush1.bf16.msra.mxu0 %v199
  %217 = vmatprep.subr.bf16.mxu0 0
  %218 = vmatpush1.bf16.msra.mxu0 %v200
  %219 = vmatprep.subr.bf16.mxu0 0
  %220 = vmatpush1.bf16.msra.mxu0 %v201
  %221 = vmatprep.subr.bf16.mxu0 0
  %222 = vmatpush1.bf16.msra.mxu0 %v202
  %223 = vmatprep.subr.bf16.mxu0 0
  %224 = vmatpush1.bf16.msra.mxu0 %v203
  %225 = vmatprep.subr.bf16.mxu0 0
  %226 = vmatpush1.bf16.msra.mxu0 %v204
  %227 = vmatprep.subr.bf16.mxu0 0
  %228 = vmatpush1.bf16.msra.mxu0 %v205
  %229 = vmatprep.subr.bf16.mxu0 0
  %230 = vmatpush1.bf16.msra.mxu0 %v206
  %231 = vmatprep.subr.bf16.mxu0 0
  %232 = vmatpush1.bf16.msra.mxu0 0
  %233 = vmatprep.subr.bf16.mxu0 0
  %234 = vmatpush1.bf16.msra.mxu0 0
  %235 = vmatprep.subr.bf16.mxu0 0
  %236 = vmatpush1.bf16.msra.mxu0 0
  %237 = vmatprep.subr.bf16.mxu0 0
  %238 = vmatpush1.bf16.msra.mxu0 0
  %239 = vmatprep.subr.bf16.mxu0 0
  %240 = vmatpush1.bf16.msra.mxu0 0
  %241 = vmatprep.subr.bf16.mxu0 0
  %242 = vmatpush1.bf16.msra.mxu0 0
  %243 = vmatprep.subr.bf16.mxu0 0
  %244 = vmatpush1.bf16.msra.mxu0 0
  %245 = vmatprep.subr.bf16.mxu0 0
  %246 = vmatpush1.bf16.msra.mxu0 0
  %247 = vmatprep.mubr.bf16.mxu0 0
  %248 = vmatmul.mubr.bf16.gmra.mrb[0].mxu0 %v143
  %v249 = vpop.f32.mrb[0].mxu0
  %v250 = vadd.f32 %v165, %v249
  %v251 = vpop.f32.mrb[0].mxu0
  %v252 = vpop.f32.mrb[0].mxu0
  %v253 = vadd.f32 %v165, %v252
  %v254 = vpop.f32.mrb[0].mxu0
  %255 = vdwg.mxu0
  %256 = vst [vmem:[%s5] sm:$0xff] %v250
  %257 = vst [vmem:[%s5 + $0x8] sm:$0xff] %v253
  // Predicated region
  $region22: #{mlp_forward.1} parent=0 // pred_check
    _
  $region23: #{mlp_forward.1} parent=0 // pred_check_branch
    %259 = sbr.rel (0) target = $region25
  $region24: #{mlp_forward.1} parent=0 // pred_region
    _
  $region25: #{mlp_forward.1} parent=0 // pred_fallthru
    _
  // Predicated region
  $region26: #{mlp_forward.1} parent=0 // pred_check
    _
  $region27: #{mlp_forward.1} parent=0 // pred_check_branch
    %261 = sbr.rel (0) target = $region29
  $region28: #{mlp_forward.1} parent=0 // pred_region
    _
  $region29: #{mlp_forward.1} parent=0 // pred_fallthru
    _

</llo_original>
